<compile_context>
chip_gen: v5e
topology: v5e:2x2
jax: 0.10.0
libtpu: 0.0.40
codegen_flags: <defaults>
</compile_context>

<pallas_src>
import jax
import jax.numpy as jnp
from jax.experimental import pallas as pl
from jax.experimental.pallas import tpu as pltpu

SEQ_LEN = 56
KW = 7                      # week-conv kernel width
LW = SEQ_LEN - KW + 1       # week-conv output width (50)
OUT_DIM = 2 + LW + 1        # global(2) + week(LW) + last-week(1) = 53


def conv_module_kernel(x_ref, w_ref, b_ref, o_ref):
    """One MXU matmul per batch tile, written directly at 53 lanes.

    x_ref : VMEM (TB, SEQ_LEN)      input tile (f32 or bf16)
    w_ref : VMEM (SEQ_LEN, OUT_DIM) combined conv weights (all three convs)
    b_ref : VMEM (1, OUT_DIM)       combined bias row (f32)
    o_ref : VMEM (TB, OUT_DIM)      output tile (f32)
    """
    o_ref[...] = (
        jnp.dot(x_ref[...], w_ref[...], preferred_element_type=jnp.float32)
        + b_ref[...]
    )


def _build_combined_weights(wg, bg, ww, bw, wl, bl, dtype=jnp.float32):
    """Fold global/week/last-week convs into one (SEQ_LEN, OUT_DIM) matrix + bias row."""
    W = jnp.zeros((SEQ_LEN, OUT_DIM), jnp.float32)

    # cols 0..1: global conv — kernel spans the whole sequence, so out1 = x @ wg.T
    W = W.at[:, 0:2].set(wg.T)

    # cols 2..51: week conv as a banded matrix: out2[:, j] = sum_k x[:, j+k] * ww[k]
    rows = (jnp.arange(LW)[:, None] + jnp.arange(KW)[None, :]).reshape(-1)            # j + k
    cols = (2 + jnp.arange(LW)[:, None] + jnp.zeros((1, KW), jnp.int32)).reshape(-1)  # 2 + j
    vals = jnp.broadcast_to(ww[None, :], (LW, KW)).reshape(-1)                        # ww[k]
    W = W.at[rows, cols].set(vals)

    # col 52: last-week conv over the final 7 timesteps
    W = W.at[SEQ_LEN - KW:, 2 + LW].set(wl[0])

    bias = jnp.zeros((1, OUT_DIM), jnp.float32)
    bias = bias.at[0, 0:2].set(bg.reshape(-1))
    bias = bias.at[0, 2:2 + LW].set(bw[0])
    bias = bias.at[0, 2 + LW].set(bl[0])
    return W.astype(dtype), bias


def conv_module_forward(x, wg, bg, ww, bw, wl, bl, *,
                        max_tile_rows=8192, use_bf16=False, xla_min_rows=0):
    """Forward pass of ConvModule (dropout = identity / eval mode).

    x: (batch, SEQ_LEN) float32. Returns (batch, OUT_DIM) float32.
    xla_min_rows: if bs < xla_min_rows, skip Pallas and let XLA fuse the matmul
                  (useful for tiny batches in a bigger graph); 0 = always Pallas.
    """
    bs = x.shape[0]
    in_dtype = jnp.bfloat16 if use_bf16 else jnp.float32
    W, bias = _build_combined_weights(wg, bg, ww, bw, wl, bl, dtype=in_dtype)
    x = x.astype(in_dtype)

    if bs < xla_min_rows:
        # Small-batch fast path: plain XLA matmul (fusable with surrounding ops).
        return x.astype(jnp.float32) @ W.astype(jnp.float32) + bias

    def cdiv(a, b):
        return -(-a // b)

    def round_up(a, m):
        return (a + m - 1) // m * m

    # Tile selection: big enough to amortize ~0.35us/step overhead, sized to
    # minimize tail waste, and >=2 steps for large batches so the "parallel"
    # grid axis can shard across both v7x TensorCores.
    n_steps = max(1, cdiv(bs, max_tile_rows))
    if bs >= 4096 and n_steps < 2:
        n_steps = 2
    tb = round_up(cdiv(bs, n_steps), 8)
    grid = (cdiv(bs, tb),)   # ragged final tile is masked by Pallas (no jnp.pad copy)

    # Explicit VMEM budget: double-buffered x + out tiles plus the tiny weight/bias,
    # with headroom; capped below v7x's 64 MiB physical VMEM.
    itemsize = jnp.dtype(in_dtype).itemsize
    vmem_needed = 2 * (tb * SEQ_LEN * itemsize + tb * OUT_DIM * 4
                       + SEQ_LEN * OUT_DIM * itemsize + OUT_DIM * 4)
    vmem_limit = int(min(max(vmem_needed + (8 << 20), 16 << 20), 48 << 20))

    out = pl.pallas_call(
        conv_module_kernel,
        out_shape=jax.ShapeDtypeStruct((bs, OUT_DIM), jnp.float32),
        grid_spec=pltpu.PrefetchScalarGridSpec(
            num_scalar_prefetch=0,
            grid=grid,
            in_specs=[
                pl.BlockSpec((tb, SEQ_LEN), lambda i: (i, 0)),         # x batch tile
                pl.BlockSpec((SEQ_LEN, OUT_DIM), lambda i: (0, 0)),    # combined weights
                pl.BlockSpec((1, OUT_DIM), lambda i: (0, 0)),          # combined bias
            ],
            out_specs=pl.BlockSpec((tb, OUT_DIM), lambda i: (i, 0)),
        ),
        compiler_params=pltpu.CompilerParams(
            dimension_semantics=("parallel",),
            vmem_limit_bytes=vmem_limit,
        ),
    )(x, W, bias)

    return out


def reference_forward(x, wg, bg, ww, bw, wl, bl):
    """Pure-JAX reference matching the PyTorch forward (dropout = eval/identity)."""
    out1 = x @ wg.T + bg                                            # (bs, 2)
    out2 = jnp.stack(
        [jnp.sum(x[:, j:j + KW] * ww, axis=1) for j in range(LW)], axis=1
    ) + bw[0]                                                       # (bs, LW)
    out3 = x[:, -KW:] @ wl.T + bl[0]                                # (bs, 1)
    return jnp.concatenate([out1, out2, out3], axis=1)


if __name__ == "__main__":
    key = jax.random.PRNGKey(0)
    k_x, k_wg, k_bg, k_ww, k_bw, k_wl, k_bl = jax.random.split(key, 7)

    bs = 8
    # Deterministic "parameters" (shapes follow nn.Conv1d defaults in __init__).
    x = jax.random.normal(k_x, (bs, SEQ_LEN), dtype=jnp.float32)
    wg = jax.random.normal(k_wg, (2, SEQ_LEN), dtype=jnp.float32) * 0.1   # Conv1d(1,2,k=56).weight squeezed
    bg = jax.random.normal(k_bg, (1, 2), dtype=jnp.float32) * 0.1         # bias (2,)
    ww = jax.random.normal(k_ww, (KW,), dtype=jnp.float32) * 0.1          # Conv1d(1,1,k=7).weight squeezed
    bw = jax.random.normal(k_bw, (1,), dtype=jnp.float32) * 0.1
    wl = jax.random.normal(k_wl, (1, KW), dtype=jnp.float32) * 0.1        # Conv1d(1,1,k=7).weight squeezed
    bl = jax.random.normal(k_bl, (1,), dtype=jnp.float32) * 0.1

    out = conv_module_forward(x, wg, bg, ww, bw, wl, bl)
    out = jax.block_until_ready(out)

    ref = reference_forward(x, wg, bg, ww, bw, wl, bl)
    assert out.shape == (bs, OUT_DIM), out.shape
    assert jnp.allclose(out, ref, atol=1e-4, rtol=1e-4), "mismatch vs reference"

    print("KERNEL_OK")
</pallas_src>

<mosaic_0001>
module attributes {stable_mosaic.version = 11 : i64} {
  func.func @conv_module_kernel(%arg0: i32, %arg1: memref<8x56xf32, #tpu.memory_space<vmem>>, %arg2: memref<56x53xf32, #tpu.memory_space<vmem>>, %arg3: memref<1x53xf32, #tpu.memory_space<vmem>>, %arg4: memref<8x53xf32, #tpu.memory_space<vmem>>) attributes {dimension_semantics = [#tpu.dimension_semantics<parallel>], iteration_bounds = array<i64: 1>, scalar_prefetch = 0 : i64, scratch_operands = 0 : i64, tpu.core_type = #tpu.core_type<tc>, window_params = [{transform_indices = @transform_0, window_bounds = array<i64: 8, 56>}, {pipeline_mode = #tpu.pipeline_mode<synchronous>, transform_indices = @transform_1, window_bounds = array<i64: 56, 53>}, {pipeline_mode = #tpu.pipeline_mode<synchronous>, transform_indices = @transform_2, window_bounds = array<i64: 1, 53>}, {transform_indices = @transform_3, window_bounds = array<i64: 8, 53>}]} {
    %c0 = arith.constant 0 : index
    %c0_0 = arith.constant 0 : index
    %0 = vector.load %arg1[%c0, %c0_0] : memref<8x56xf32, #tpu.memory_space<vmem>>, vector<8x56xf32>
    %c0_1 = arith.constant 0 : index
    %c0_2 = arith.constant 0 : index
    %1 = vector.load %arg2[%c0_1, %c0_2] : memref<56x53xf32, #tpu.memory_space<vmem>>, vector<56x53xf32>
    %cst = arith.constant dense<0.000000e+00> : vector<8x53xf32>
    %2 = tpu.matmul %0, %1, %cst {dimension_numbers = #tpu.dot_dimension_numbers<[1], [0], [0], [1], [0, 0, 1, 1], [], []>} : vector<8x56xf32>, vector<56x53xf32>, vector<8x53xf32> -> vector<8x53xf32>
    %c0_3 = arith.constant 0 : index
    %c0_4 = arith.constant 0 : index
    %3 = vector.load %arg3[%c0_3, %c0_4] : memref<1x53xf32, #tpu.memory_space<vmem>>, vector<1x53xf32>
    %4 = vector.broadcast %3 : vector<1x53xf32> to vector<8x53xf32>
    %5 = arith.addf %2, %4 : vector<8x53xf32>
    %c0_5 = arith.constant 0 : index
    %c0_6 = arith.constant 0 : index
    %6 = vector.load %arg4[%c0_5, %c0_6] : memref<8x53xf32, #tpu.memory_space<vmem>>, vector<8x53xf32>
    tpu.vector_store %arg4[%c0_5, %c0_6], %5 {strides = array<i32>} : memref<8x53xf32, #tpu.memory_space<vmem>>, vector<8x53xf32>,
    return
  }
  func.func @transform_0(%arg0: i32) -> (i32, i32) {
    %c0_i32 = arith.constant 0 : i32
    %c0_i32_0 = arith.constant 0 : i32
    return %arg0, %c0_i32 : i32, i32
  }
  func.func @transform_1(%arg0: i32) -> (i32, i32) {
    %c0_i32 = arith.constant 0 : i32
    %c0_i32_0 = arith.constant 0 : i32
    %c0_i32_1 = arith.constant 0 : i32
    return %c0_i32, %c0_i32_0 : i32, i32
  }
  func.func @transform_2(%arg0: i32) -> (i32, i32) {
    %c0_i32 = arith.constant 0 : i32
    %c0_i32_0 = arith.constant 0 : i32
    %c0_i32_1 = arith.constant 0 : i32
    return %c0_i32, %c0_i32_0 : i32, i32
  }
  func.func @transform_3(%arg0: i32) -> (i32, i32) {
    %c0_i32 = arith.constant 0 : i32
    %c0_i32_0 = arith.constant 0 : i32
    return %arg0, %c0_i32 : i32, i32
  }
}

</mosaic_0001>

<llo_original>
// kernel: tpu_custom_call.1
$region0: #{tpu_custom_call.1}
  #allocation0 [shape = 'u32[]', space=smem, size = 0x4, offset = 0x4, fixed_abs, tag = 'smem constant byte address 0x4 - core index']
  #allocation1 [shape = 'u32[72,128]{1,0:T(1,128)}', space=vmem, size = 0x9000, scoped, tag = 'internal scratch']
  %s0 = inlined_call_operand.hbm [shape: f32[8,56], index: 0, kind: input, shape index: {}]
  %s1 = inlined_call_operand.hbm [shape: f32[56,53], index: 1, kind: input, shape index: {}]
  %s2 = inlined_call_operand.vmem [shape: f32[1,53], index: 2, kind: input, shape index: {}]
  %s3 = inlined_call_operand.hbm [shape: f32[8,53], index: 3, kind: output, shape index: {}]
  %s4 = sld [smem:[#allocation0]]
  $region30: #{tpu_custom_call.1} parent=0
    _
  %s6 = ssub.s32 1, %s4
  %s7 = scalar_select 0, %s6, %s4
  $region1: #{tpu_custom_call.1} parent=0
    #allocation2 [shape = 'u8[4096]{0}', space=vmem, size = 0x1000, scoped, tag = 'input window, operand 0, single buffered']
    #allocation3 [shape = 's32[1]{0}', space=sflag, size = 0x4, scoped, tag = 'scoped memory for tpu_custom_call.1']
    #allocation4 [shape = 's32[1]{0}', space=sflag, size = 0x4, scoped, tag = 'scoped memory for tpu_custom_call.1']
    #allocation5 [shape = 'u8[28672]{0}', space=vmem, size = 0x7000, scoped, tag = 'input window, operand 1, single buffered']
    #allocation6 [shape = 's32[1]{0}', space=sflag, size = 0x4, scoped, tag = 'scoped memory for tpu_custom_call.1']
    #allocation7 [shape = 'u8[4096]{0}', space=vmem, size = 0x1000, scoped, tag = 'output window, operand 0, single buffered']
    %8 = vsyncpa [#allocation3], 0
    %9 = vsyncpa [#allocation6], 0
    %10 = vsyncpa [#allocation4], 0
    // Predicated region
    $region2: #{tpu_custom_call.1} parent=1 // pred_check
      _
    $region3: #{tpu_custom_call.1} parent=1 // pred_check_branch
      %12 = sbr.rel (0) target = $region5
    $region4: #{tpu_custom_call.1} parent=1 // pred_region
      %14 = vsyncadd [#allocation3], 0
      %s16 = sshll.u32 %s0, 4
      %s17 = int_to_ptr.hbm [resolvable:$true] %s16
      %s18 = sshll.u32 [#allocation2], 4
      %s19 = int_to_ptr.vmem [resolvable:$true] %s18
      %21 = dma.hbm_to_vmem [thread:$0]  %s17, 128, %s19, [#allocation3]
    $region5: #{tpu_custom_call.1} parent=1 // pred_fallthru
      _
    // Predicated region
    $region6: #{tpu_custom_call.1} parent=1 // pred_check
      _
    $region7: #{tpu_custom_call.1} parent=1 // pred_check_branch
      %23 = sbr.rel (0) target = $region9
    $region8: #{tpu_custom_call.1} parent=1 // pred_region
      %25 = vsyncadd [#allocation6], 0
      %s26 = sshll.u32 %s1, 4
      %s27 = int_to_ptr.hbm [resolvable:$true] %s26
      %s28 = sshll.u32 [#allocation5], 4
      %s29 = int_to_ptr.vmem [resolvable:$true] %s28
      %34 = dma.hbm_to_vmem [thread:$0]  %s27, 896, %s29, [#allocation6], 128, 128, 8
    $region9: #{tpu_custom_call.1} parent=1 // pred_fallthru
      _
    // Predicated region
    $region10: #{tpu_custom_call.1} parent=1 // pred_check
      _
    $region11: #{tpu_custom_call.1} parent=1 // pred_check_branch
      %36 = sbr.rel (0) target = $region13
    $region12: #{tpu_custom_call.1} parent=1 // pred_region
      _
    $region13: #{tpu_custom_call.1} parent=1 // pred_fallthru
      _
    // Predicated region
    $region14: #{tpu_custom_call.1} parent=1 // pred_check
      _
    $region15: #{tpu_custom_call.1} parent=1 // pred_check_branch
      %38 = sbr.rel (0) target = $region17
    $region16: #{tpu_custom_call.1} parent=1 // pred_region
      %40 = dma.done [#allocation3], 128
    $region17: #{tpu_custom_call.1} parent=1 // pred_fallthru
      _
    // Predicated region
    $region18: #{tpu_custom_call.1} parent=1 // pred_check
      _
    $region19: #{tpu_custom_call.1} parent=1 // pred_check_branch
      %42 = sbr.rel (0) target = $region21
    $region20: #{tpu_custom_call.1} parent=1 // pred_region
      %44 = dma.done [#allocation6], 896
    $region21: #{tpu_custom_call.1} parent=1 // pred_fallthru
      _
    %v45 = vld [vmem:[#allocation2] sm:$0xff]
    %v46 = vld [vmem:[#allocation5] sm:$0xff]
    %v47 = vld [vmem:[#allocation5 + $0x8] sm:$0xff]
    %v48 = vld [vmem:[#allocation5 + $0x10] sm:$0xff]
    %v49 = vld [vmem:[#allocation5 + $0x18] sm:$0xff]
    %v50 = vld [vmem:[#allocation5 + $0x20] sm:$0xff]
    %v51 = vld [vmem:[#allocation5 + $0x28] sm:$0xff]
    %v52 = vld [vmem:[#allocation5 + $0x30] sm:$0xff]
    %v53 = vld [vmem:[%s2] sm:$0x1]
    %v55 = vperm.slane %v53, 0
    %vm57 = vcmask 457728
    %v59 = vsel %vm57, %v45, 0
    %61 = vmatpush.msra.mxu0 0.0
    %62 = vmatpush.msra.mxu0 0.0
    %63 = vmatpush.msra.mxu0 0.0
    %64 = vmatpush.msra.mxu0 0.0
    %65 = vmatpush.msra.mxu0 0.0
    %66 = vmatpush.msra.mxu0 0.0
    %67 = vmatpush.msra.mxu0 0.0
    %68 = vmatpush.msra.mxu0 0.0
    %69 = vmatpush.msra.mxu0 0.0
    %70 = vmatpush.msra.mxu0 %v52
    %71 = vmatpush.msra.mxu0 %v51
    %72 = vmatpush.msra.mxu0 %v50
    %73 = vmatpush.msra.mxu0 %v49
    %74 = vmatpush.msra.mxu0 %v48
    %75 = vmatpush.msra.mxu0 %v47
    %76 = vmatpush.msra.mxu0 %v46
    %77 = vmatmul.f32.gmra.mxu0 %v59
    %v78 = vpop.f32.mrf.mxu0
    %v79 = vadd.f32 %v55, %v78
    %80 = vdwg.mxu0
    %vm81 = vcmask 433152
    %82 = vst.msk [vmem:[#allocation7] sm:$0xff] %vm81, %v79
    // Predicated region
    $region22: #{tpu_custom_call.1} parent=1 // pred_check
      _
    $region23: #{tpu_custom_call.1} parent=1 // pred_check_branch
      %84 = sbr.rel (0) target = $region25
    $region24: #{tpu_custom_call.1} parent=1 // pred_region
      %86 = vsyncadd [#allocation4], 0
      %s88 = sshll.u32 [#allocation7], 4
      %s89 = int_to_ptr.vmem [resolvable:$true] %s88
      %s90 = sshll.u32 %s3, 4
      %s91 = int_to_ptr.hbm [resolvable:$true] %s90
      %93 = dma.vmem_to_hbm [thread:$0]  %s89, 128, %s91, [#allocation4]
    $region25: #{tpu_custom_call.1} parent=1 // pred_fallthru
      _
    // Predicated region
    $region26: #{tpu_custom_call.1} parent=1 // pred_check
      _
    $region27: #{tpu_custom_call.1} parent=1 // pred_check_branch
      %95 = sbr.rel (0) target = $region29
    $region28: #{tpu_custom_call.1} parent=1 // pred_region
      %97 = dma.done [#allocation4], 128
    $region29: #{tpu_custom_call.1} parent=1 // pred_fallthru
      _
    %98 = vsyncpa [#allocation3], 1
    %99 = vsyncpa [#allocation6], 1
    %100 = vsyncpa [#allocation4], 1

</llo_original>
